<compile_context>
chip_gen: v6e
topology: v6e:2x2x1
jax: 0.10.0
libtpu: 0.0.40
codegen_flags: <defaults>
</compile_context>

<pallas_src>
import functools

import jax
import jax.numpy as jnp
from jax import lax
from jax.experimental import pallas as pl
from jax.experimental.pallas import tpu as pltpu

BN_EPS = 1e-5
LEAKY_SLOPE = 0.1
LANE = 128


def _round_up(x, m):
    return (x + m - 1) // m * m


# ---------------------------------------------------------------------------
# Pallas kernels
# ---------------------------------------------------------------------------
def _matmul_stats_kernel(a_ref, w_ref, stats_ref):
    """Pass 1: per-M-tile conv matmul + single-pass BN statistics.

    a_ref:     (tm, K)     bf16 im2col tile
    w_ref:     (K, Cp)     bf16 weight matrix (C_out zero-padded to 128 lanes)
    stats_ref: (1, 2, Cp)  f32  [sum(y), sum(y*y)] over this tile's rows
    """
    y = jnp.dot(a_ref[...], w_ref[...], preferred_element_type=jnp.float32)
    s1 = jnp.sum(y, axis=0, keepdims=True)        # (1, Cp)
    s2 = jnp.sum(y * y, axis=0, keepdims=True)    # (1, Cp)
    stats_ref[...] = jnp.concatenate([s1, s2], axis=0)[None, :, :]


def _matmul_bn_lrelu_kernel(a_ref, w_ref, scale_ref, shift_ref, o_ref):
    """Pass 2: recompute the (cheap) matmul, apply folded BN + LeakyReLU(0.1)."""
    y = jnp.dot(a_ref[...], w_ref[...], preferred_element_type=jnp.float32)
    yh = y * scale_ref[...] + shift_ref[...]      # (tm, Cp) * (1, Cp) broadcast, f32 VPU math
    o_ref[...] = jnp.where(yh >= 0, yh, LEAKY_SLOPE * yh)


# ---------------------------------------------------------------------------
# Glue: lean im2col + wrapper
# ---------------------------------------------------------------------------
# TODO(synk): fold the patch extraction into the Pallas kernel itself (k*k shifted
# (tm, C_in)@(C_in, Cp) accumulated matmuls over an NHWC block) to remove the k^2
# HBM expansion of the patch matrix entirely.
def _im2col_nhwc(x, kernel_size, stride, padding):
    """(N, C, H, W) -> (N*Ho*Wo, k*k*C) patch matrix; column order (ki, kj, c), c fastest."""
    n, c, h, w = x.shape
    k, s, p = kernel_size, stride, padding
    ho = (h + 2 * p - k) // s + 1
    wo = (w + 2 * p - k) // s + 1
    xhwc = jnp.transpose(x, (0, 2, 3, 1))                            # NHWC
    xp = jnp.pad(xhwc, ((0, 0), (p, p), (p, p), (0, 0)))
    cols = [xp[:, ki:ki + s * ho:s, kj:kj + s * wo:s, :]             # (N, Ho, Wo, C)
            for ki in range(k) for kj in range(k)]
    a = jnp.concatenate(cols, axis=-1)                               # (N, Ho, Wo, k*k*C)
    return a.reshape(n * ho * wo, k * k * c), ho, wo


@functools.partial(jax.jit,
                   static_argnames=("stride", "padding", "block_m", "compute_dtype"))
def convolutional_layer(x, weight, gamma, beta, *, stride, padding,
                        block_m=512, compute_dtype=jnp.bfloat16):
    """Forward pass of ConvolutionalLayer.  x: (N, C_in, H, W), weight: (C_out, C_in, k, k)."""
    n, c_in, h, w = x.shape
    c_out, _, k, _ = weight.shape
    assert block_m % 8 == 0

    a, ho, wo = _im2col_nhwc(x.astype(jnp.float32), k, stride, padding)   # (M, K)
    m, kk = a.shape
    cp = _round_up(c_out, LANE)                  # lane-dense output channels
    num_tiles = pl.cdiv(m, block_m)
    m_pad = num_tiles * block_m

    a_pad = jnp.pad(a, ((0, m_pad - m), (0, 0))).astype(compute_dtype)
    # OIHW weight -> (k, k, C_in, C_out) -> (K, C_out), matching the im2col column order.
    w_mat = jnp.transpose(weight.astype(jnp.float32), (2, 3, 1, 0)).reshape(kk, c_out)
    w_pad = jnp.pad(w_mat, ((0, 0), (0, cp - c_out))).astype(compute_dtype)

    # ---- Pass 1: fused matmul + per-tile BN stats (no conv intermediate in HBM).
    stats = pl.pallas_call(
        _matmul_stats_kernel,
        out_shape=jax.ShapeDtypeStruct((num_tiles, 2, cp), jnp.float32),
        grid=(num_tiles,),
        in_specs=[
            pl.BlockSpec((block_m, kk), lambda i: (i, 0)),
            pl.BlockSpec((kk, cp), lambda i: (0, 0)),
        ],
        out_specs=pl.BlockSpec((1, 2, cp), lambda i: (i, 0, 0)),
        compiler_params=pltpu.CompilerParams(dimension_semantics=("parallel",)),
    )(a_pad, w_pad)

    # ---- Tiny cross-tile reduction + BN fold in XLA.  Zero-padded rows (and the
    # zero-padded weight columns) contribute exactly 0 to both sums, so dividing
    # by the true M keeps the batch statistics correct.
    sums = jnp.sum(stats[:, 0, :], axis=0)                            # (Cp,)
    sqs = jnp.sum(stats[:, 1, :], axis=0)                             # (Cp,)
    inv_m = 1.0 / m
    mean = sums * inv_m
    var = jnp.maximum(sqs * inv_m - mean * mean, 0.0)                 # biased var (PyTorch BN), guard cancellation
    inv_std = lax.rsqrt(var + BN_EPS)
    gamma_p = jnp.pad(gamma.astype(jnp.float32), (0, cp - c_out))
    beta_p = jnp.pad(beta.astype(jnp.float32), (0, cp - c_out))
    scale = (gamma_p * inv_std).reshape(1, cp)
    shift = (beta_p - mean * gamma_p * inv_std).reshape(1, cp)

    # ---- Pass 2: recompute matmul, apply BN + LeakyReLU, lane-dense stores.
    y = pl.pallas_call(
        _matmul_bn_lrelu_kernel,
        out_shape=jax.ShapeDtypeStruct((m_pad, cp), jnp.float32),
        grid=(num_tiles,),
        in_specs=[
            pl.BlockSpec((block_m, kk), lambda i: (i, 0)),
            pl.BlockSpec((kk, cp), lambda i: (0, 0)),
            pl.BlockSpec((1, cp), lambda i: (0, 0)),
            pl.BlockSpec((1, cp), lambda i: (0, 0)),
        ],
        out_specs=pl.BlockSpec((block_m, cp), lambda i: (i, 0)),
        compiler_params=pltpu.CompilerParams(dimension_semantics=("parallel",)),
    )(a_pad, w_pad, scale, shift)

    # (M_pad, Cp) -> slice pads -> (N, Ho, Wo, C_out) -> NCHW
    return y[:m, :c_out].reshape(n, ho, wo, c_out).transpose(0, 3, 1, 2)


# ---------------------------------------------------------------------------
# Pure-JAX reference (for correctness check)
# ---------------------------------------------------------------------------
def _reference(x, weight, gamma, beta, stride, padding):
    y = lax.conv_general_dilated(
        x.astype(jnp.float32), weight.astype(jnp.float32),
        window_strides=(stride, stride),
        padding=[(padding, padding), (padding, padding)],
        dimension_numbers=("NCHW", "OIHW", "NCHW"),
        precision=lax.Precision.HIGHEST,
    )
    mean = jnp.mean(y, axis=(0, 2, 3), keepdims=True)
    var = jnp.mean((y - mean) ** 2, axis=(0, 2, 3), keepdims=True)
    yh = (y - mean) * lax.rsqrt(var + BN_EPS)
    yh = yh * gamma.reshape(1, -1, 1, 1) + beta.reshape(1, -1, 1, 1)
    return jnp.where(yh >= 0, yh, LEAKY_SLOPE * yh)


# ---------------------------------------------------------------------------
if __name__ == "__main__":
    # Module hyper-params (small, consistent with a YOLOv3 ConvolutionalLayer block)
    batch, in_channels, out_channels = 2, 4, 8
    height = width = 16
    kernel_size, stride, padding = 3, 1, 1

    key = jax.random.PRNGKey(0)
    kx, kw, kg, kb = jax.random.split(key, 4)
    x = jax.random.normal(kx, (batch, in_channels, height, width), dtype=jnp.float32)
    # Conv2d weight: (C_out, C_in, k, k), bias=False per the module.
    weight = 0.1 * jax.random.normal(
        kw, (out_channels, in_channels, kernel_size, kernel_size), dtype=jnp.float32
    )
    # BatchNorm2d affine params: (C_out,) each (deterministic synthetic init).
    gamma = 1.0 + 0.1 * jax.random.normal(kg, (out_channels,), dtype=jnp.float32)
    beta = 0.1 * jax.random.normal(kb, (out_channels,), dtype=jnp.float32)

    # block_m=256 so the toy M=512 exercises a multi-tile grid (default 512 for large layers).
    out = convolutional_layer(x, weight, gamma, beta,
                              stride=stride, padding=padding, block_m=256)
    out = jax.block_until_ready(out)

    # Reference on bf16-quantized inputs: the kernel feeds the MXU in bf16 (f32 accumulation),
    # so compare against the same quantized operands.
    xq = x.astype(jnp.bfloat16).astype(jnp.float32)
    wq = weight.astype(jnp.bfloat16).astype(jnp.float32)
    ref = _reference(xq, wq, gamma, beta, stride, padding)

    assert out.shape == ref.shape == (batch, out_channels, height, width), out.shape
    max_err = float(jnp.max(jnp.abs(out - ref)))
    assert jnp.allclose(out, ref, atol=1e-3, rtol=1e-3), max_err

    print("KERNEL_OK")
</pallas_src>

<mosaic_0001>
module attributes {stable_mosaic.version = 11 : i64} {
  func.func @_matmul_stats_kernel(%arg0: i32, %arg1: memref<256x36xbf16, #tpu.memory_space<vmem>>, %arg2: memref<36x128xbf16, #tpu.memory_space<vmem>>, %arg3: memref<1x2x128xf32, #tpu.memory_space<vmem>>) attributes {dimension_semantics = [#tpu.dimension_semantics<parallel>], iteration_bounds = array<i64: 2>, scalar_prefetch = 0 : i64, scratch_operands = 0 : i64, tpu.core_type = #tpu.core_type<tc>, window_params = [{transform_indices = @transform_0, window_bounds = array<i64: 256, 36>}, {pipeline_mode = #tpu.pipeline_mode<synchronous>, transform_indices = @transform_1, window_bounds = array<i64: 36, 128>}, {transform_indices = @transform_2, window_bounds = array<i64: 1, 2, 128>}]} {
    %c0 = arith.constant 0 : index
    %c0_0 = arith.constant 0 : index
    %0 = vector.load %arg1[%c0, %c0_0] : memref<256x36xbf16, #tpu.memory_space<vmem>>, vector<256x36xbf16>
    %c0_1 = arith.constant 0 : index
    %c0_2 = arith.constant 0 : index
    %1 = vector.load %arg2[%c0_1, %c0_2] : memref<36x128xbf16, #tpu.memory_space<vmem>>, vector<36x128xbf16>
    %cst = arith.constant dense<0.000000e+00> : vector<256x128xf32>
    %2 = tpu.matmul %0, %1, %cst {dimension_numbers = #tpu.dot_dimension_numbers<[1], [0], [0], [1], [0, 0, 1, 1], [], []>} : vector<256x36xbf16>, vector<36x128xbf16>, vector<256x128xf32> -> vector<256x128xf32>
    %cst_3 = arith.constant dense<0.000000e+00> : vector<128xf32>
    %3 = vector.multi_reduction <add>, %2, %cst_3 [0] : vector<256x128xf32> to vector<128xf32>
    %4 = vector.shape_cast %3 : vector<128xf32> to vector<1x128xf32>
    %5 = arith.mulf %2, %2 : vector<256x128xf32>
    %cst_4 = arith.constant dense<0.000000e+00> : vector<128xf32>
    %6 = vector.multi_reduction <add>, %5, %cst_4 [0] : vector<256x128xf32> to vector<128xf32>
    %7 = vector.shape_cast %6 : vector<128xf32> to vector<1x128xf32>
    %8 = tpu.concatenate %4, %7 in 0 : vector<1x128xf32>, vector<1x128xf32> -> vector<2x128xf32>
    %9 = vector.shape_cast %8 : vector<2x128xf32> to vector<1x2x128xf32>
    %c0_5 = arith.constant 0 : index
    %c0_6 = arith.constant 0 : index
    %c0_7 = arith.constant 0 : index
    %10 = vector.load %arg3[%c0_5, %c0_6, %c0_7] : memref<1x2x128xf32, #tpu.memory_space<vmem>>, vector<1x2x128xf32>
    tpu.vector_store %arg3[%c0_5, %c0_6, %c0_7], %9 {strides = array<i32>} : memref<1x2x128xf32, #tpu.memory_space<vmem>>, vector<1x2x128xf32>,
    return
  }
  func.func @transform_0(%arg0: i32) -> (i32, i32) {
    %c0_i32 = arith.constant 0 : i32
    %c0_i32_0 = arith.constant 0 : i32
    return %arg0, %c0_i32 : i32, i32
  }
  func.func @transform_1(%arg0: i32) -> (i32, i32) {
    %c0_i32 = arith.constant 0 : i32
    %c0_i32_0 = arith.constant 0 : i32
    %c0_i32_1 = arith.constant 0 : i32
    return %c0_i32, %c0_i32_0 : i32, i32
  }
  func.func @transform_2(%arg0: i32) -> (i32, i32, i32) {
    %c0_i32 = arith.constant 0 : i32
    %c0_i32_0 = arith.constant 0 : i32
    %c0_i32_1 = arith.constant 0 : i32
    return %arg0, %c0_i32, %c0_i32_0 : i32, i32, i32
  }
}

module attributes {stable_mosaic.version = 11 : i64} {
  func.func @_matmul_bn_lrelu_kernel(%arg0: i32, %arg1: memref<256x36xbf16, #tpu.memory_space<vmem>>, %arg2: memref<36x128xbf16, #tpu.memory_space<vmem>>, %arg3: memref<1x128xf32, #tpu.memory_space<vmem>>, %arg4: memref<1x128xf32, #tpu.memory_space<vmem>>, %arg5: memref<256x128xf32, #tpu.memory_space<vmem>>) attributes {dimension_semantics = [#tpu.dimension_semantics<parallel>], iteration_bounds = array<i64: 2>, scalar_prefetch = 0 : i64, scratch_operands = 0 : i64, tpu.core_type = #tpu.core_type<tc>, window_params = [{transform_indices = @transform_0, window_bounds = array<i64: 256, 36>}, {pipeline_mode = #tpu.pipeline_mode<synchronous>, transform_indices = @transform_1, window_bounds = array<i64: 36, 128>}, {pipeline_mode = #tpu.pipeline_mode<synchronous>, transform_indices = @transform_2, window_bounds = array<i64: 1, 128>}, {pipeline_mode = #tpu.pipeline_mode<synchronous>, transform_indices = @transform_3, window_bounds = array<i64: 1, 128>}, {transform_indices = @transform_4, window_bounds = array<i64: 256, 128>}]} {
    %c0 = arith.constant 0 : index
    %c0_0 = arith.constant 0 : index
    %0 = vector.load %arg1[%c0, %c0_0] : memref<256x36xbf16, #tpu.memory_space<vmem>>, vector<256x36xbf16>
    %c0_1 = arith.constant 0 : index
    %c0_2 = arith.constant 0 : index
    %1 = vector.load %arg2[%c0_1, %c0_2] : memref<36x128xbf16, #tpu.memory_space<vmem>>, vector<36x128xbf16>
    %cst = arith.constant dense<0.000000e+00> : vector<256x128xf32>
    %2 = tpu.matmul %0, %1, %cst {dimension_numbers = #tpu.dot_dimension_numbers<[1], [0], [0], [1], [0, 0, 1, 1], [], []>} : vector<256x36xbf16>, vector<36x128xbf16>, vector<256x128xf32> -> vector<256x128xf32>
    %c0_3 = arith.constant 0 : index
    %c0_4 = arith.constant 0 : index
    %3 = vector.load %arg3[%c0_3, %c0_4] : memref<1x128xf32, #tpu.memory_space<vmem>>, vector<1x128xf32>
    %4 = vector.broadcast %3 : vector<1x128xf32> to vector<256x128xf32>
    %5 = arith.mulf %2, %4 : vector<256x128xf32>
    %c0_5 = arith.constant 0 : index
    %c0_6 = arith.constant 0 : index
    %6 = vector.load %arg4[%c0_5, %c0_6] : memref<1x128xf32, #tpu.memory_space<vmem>>, vector<1x128xf32>
    %7 = vector.broadcast %6 : vector<1x128xf32> to vector<256x128xf32>
    %8 = arith.addf %5, %7 : vector<256x128xf32>
    %cst_7 = arith.constant 0.000000e+00 : f32
    %9 = vector.broadcast %cst_7 : f32 to vector<256x128xf32>
    %10 = arith.cmpf oge, %8, %9 : vector<256x128xf32>
    %cst_8 = arith.constant 1.000000e-01 : f32
    %11 = vector.broadcast %cst_8 : f32 to vector<256x128xf32>
    %12 = arith.mulf %11, %8 : vector<256x128xf32>
    %13 = arith.select %10, %8, %12 : vector<256x128xi1>, vector<256x128xf32>
    %c0_9 = arith.constant 0 : index
    %c0_10 = arith.constant 0 : index
    %14 = vector.load %arg5[%c0_9, %c0_10] : memref<256x128xf32, #tpu.memory_space<vmem>>, vector<256x128xf32>
    tpu.vector_store %arg5[%c0_9, %c0_10], %13 {strides = array<i32>} : memref<256x128xf32, #tpu.memory_space<vmem>>, vector<256x128xf32>,
    return
  }
  func.func @transform_0(%arg0: i32) -> (i32, i32) {
    %c0_i32 = arith.constant 0 : i32
    %c0_i32_0 = arith.constant 0 : i32
    return %arg0, %c0_i32 : i32, i32
  }
  func.func @transform_1(%arg0: i32) -> (i32, i32) {
    %c0_i32 = arith.constant 0 : i32
    %c0_i32_0 = arith.constant 0 : i32
    %c0_i32_1 = arith.constant 0 : i32
    return %c0_i32, %c0_i32_0 : i32, i32
  }
  func.func @transform_2(%arg0: i32) -> (i32, i32) {
    %c0_i32 = arith.constant 0 : i32
    %c0_i32_0 = arith.constant 0 : i32
    %c0_i32_1 = arith.constant 0 : i32
    return %c0_i32, %c0_i32_0 : i32, i32
  }
  func.func @transform_3(%arg0: i32) -> (i32, i32) {
    %c0_i32 = arith.constant 0 : i32
    %c0_i32_0 = arith.constant 0 : i32
    %c0_i32_1 = arith.constant 0 : i32
    return %c0_i32, %c0_i32_0 : i32, i32
  }
  func.func @transform_4(%arg0: i32) -> (i32, i32) {
    %c0_i32 = arith.constant 0 : i32
    %c0_i32_0 = arith.constant 0 : i32
    return %arg0, %c0_i32 : i32, i32
  }
}

</mosaic_0001>

<llo_original>
// kernel: convolutional_layer.2
$region0: #{convolutional_layer.2}
  #allocation0 [shape = 'u32[]', space=smem, size = 0x4, offset = 0x4, fixed_abs, tag = 'smem constant byte address 0x4 - core index']
  #allocation1 [shape = 'u32[144,128]{1,0:T(1,128)}', space=vmem, size = 0x12000, scoped, tag = 'internal scratch']
  %s0 = inlined_call_operand.vmem [shape: bf16[512,36], index: 0, kind: input, shape index: {}]
  %s1 = inlined_call_operand.vmem [shape: bf16[36,128], index: 1, kind: input, shape index: {}]
  %s2 = inlined_call_operand.vmem [shape: f32[2,2,128], index: 2, kind: output, shape index: {}]
  %s3 = sld [smem:[#allocation0]]
  $region41: #{convolutional_layer.2} parent=0
    _
  %s5 = ssub.s32 1, %s3
  %s6 = scalar_select 0, %s5, %s3
  loop: start=0, step=1, limit=4
  $region2: #{convolutional_layer.2} parent=0 // loop_pre_header
    _
  $region3: #{convolutional_layer.2} parent=0 // loop_header
    %s8 = sphi 0, %s12
    %p9 = scmp.ge.s32.totalorder %s8, 4
    %s18 = sphi 0, %s20
    %s21 = sphi 0, %s18
    %s22 = sphi 0, %s21
    %s38 = sphi 0, %s22
    %s42 = sphi 0, %s42
    %s44 = sphi 0, %s42
    %s45 = sphi 0, %s44
    %s59 = sphi 0, %s45
    %s65 = sphi 0, %s67
    %s68 = sphi 0, %s65
    %s69 = sphi 0, %s68
    %s85 = sphi 0, %s69
  $region4: #{convolutional_layer.2} parent=0 // loop_header_branch
    %11 = sbr.rel (%p9) target = $region8
  $region5: #{convolutional_layer.2} parent=0 // loop_body
    %s13 = ssub.s32 %s8, 1
    %s14 = ssub.s32 %s8, 2
    %s15 = sadd.s32 %s8, 1
    %s16 = ssub.s32 %s8, %s15
    %p17 = scmp.eq.s32.totalorder %s16, 0
    %s19 = sadd.s32 %s18, 1
    %s20 = scalar_select %p17, %s18, %s19
    %p23 = pneg %p17
    %p24 = scmp.eq.s32.totalorder %s8, 1
    %p25 = por %p23, %p24
    %p26 = scmp.ne.s32.totalorder %s18, %s21
    %p27 = scmp.eq.s32.totalorder %s8, 0
    %p28 = por %p26, %p27
    %p29 = scmp.ne.s32.totalorder %s18, %s21
    %p30 = scmp.eq.s32.totalorder %s13, 1
    %p31 = por %p29, %p30
    %p32 = scmp.ne.s32.totalorder %s21, %s22
    %p33 = scmp.eq.s32.totalorder %s13, 0
    %p34 = por %p32, %p33
    %p35 = scmp.ne.s32.totalorder %s21, %s22
    %p36 = scmp.eq.s32.totalorder %s14, 1
    %p37 = por %p35, %p36
    %p39 = scmp.ne.s32.totalorder %s22, %s38
    %p40 = scmp.eq.s32.totalorder %s14, 0
    %p41 = por %p39, %p40
    %s43 = sadd.s32 %s42, 1
    %p46 = scmp.eq.s32.totalorder %s8, 1
    %p47 = scmp.ne.s32.totalorder %s42, %s44
    %p48 = scmp.eq.s32.totalorder %s8, 0
    %p49 = por %p47, %p48
    %p50 = scmp.ne.s32.totalorder %s42, %s44
    %p51 = scmp.eq.s32.totalorder %s13, 1
    %p52 = por %p50, %p51
    %p53 = scmp.ne.s32.totalorder %s44, %s45
    %p54 = scmp.eq.s32.totalorder %s13, 0
    %p55 = por %p53, %p54
    %p56 = scmp.ne.s32.totalorder %s44, %s45
    %p57 = scmp.eq.s32.totalorder %s14, 1
    %p58 = por %p56, %p57
    %p60 = scmp.ne.s32.totalorder %s45, %s59
    %p61 = scmp.eq.s32.totalorder %s14, 0
    %p62 = por %p60, %p61
    %s63 = ssub.s32 %s8, %s15
    %p64 = scmp.eq.s32.totalorder %s63, 0
    %s66 = sadd.s32 %s65, 1
    %s67 = scalar_select %p64, %s65, %s66
    %p70 = pneg %p64
    %p71 = scmp.eq.s32.totalorder %s8, 1
    %p72 = por %p70, %p71
    %p73 = scmp.ne.s32.totalorder %s65, %s68
    %p74 = scmp.eq.s32.totalorder %s8, 0
    %p75 = por %p73, %p74
    %p76 = scmp.ne.s32.totalorder %s65, %s68
    %p77 = scmp.eq.s32.totalorder %s13, 1
    %p78 = por %p76, %p77
    %p79 = scmp.ne.s32.totalorder %s68, %s69
    %p80 = scmp.eq.s32.totalorder %s13, 0
    %p81 = por %p79, %p80
    %p82 = scmp.ne.s32.totalorder %s68, %s69
    %p83 = scmp.eq.s32.totalorder %s14, 1
    %p84 = por %p82, %p83
    %p86 = scmp.ne.s32.totalorder %s69, %s85
    %p87 = scmp.eq.s32.totalorder %s14, 0
    %p88 = por %p86, %p87
    %p89 = scmp.le.s32.totalorder 1, %s8
    %p90 = scmp.lt.s32.totalorder %s8, 3
    %p91 = pnand %p89, %p90
    %p92 = pneg %p91
    // Predicated region
    $region9: #{convolutional_layer.2} parent=5 // pred_check
      _
    $region10: #{convolutional_layer.2} parent=5 // pred_check_branch
      %94 = sbr.rel (%p91) target = $region12
    $region11: #{convolutional_layer.2} parent=5 // pred_region
      %s95 = ssub.s32 %s8, 1
      // Predicated region
      $region13: #{convolutional_layer.2} parent=11 // pred_check
        %p96 = pneg %p55
      $region14: #{convolutional_layer.2} parent=11 // pred_check_branch
        %98 = sbr.rel (%p96) target = $region16
      $region15: #{convolutional_layer.2} parent=11 // pred_region
        _
      $region16: #{convolutional_layer.2} parent=11 // pred_fallthru
        _
    $region12: #{convolutional_layer.2} parent=5 // pred_fallthru
      _
    %p99 = scmp.lt.s32.totalorder %s8, 2
    // Predicated region
    $region17: #{convolutional_layer.2} parent=5 // pred_check
      %p100 = pneg %p99
    $region18: #{convolutional_layer.2} parent=5 // pred_check_branch
      %102 = sbr.rel (%p100) target = $region20
    $region19: #{convolutional_layer.2} parent=5 // pred_region
      // Predicated region
      $region21: #{convolutional_layer.2} parent=19 // pred_check
        %p103 = pneg %p28
      $region22: #{convolutional_layer.2} parent=19 // pred_check_branch
        %105 = sbr.rel (%p103) target = $region24
      $region23: #{convolutional_layer.2} parent=19 // pred_region
        %s106 = smul.u32 32, %s8
        %p107 = scmp.lt.s32.totalorder %s106, 63
        %s108 = scalar_select %p107, %s106, 63
        %s109 = smul.addr %s108, 4
        %s110 = scalar_lea.vmem %s0, %s109
        %s111 = smul.u32 32, %s8
      $region24: #{convolutional_layer.2} parent=19 // pred_fallthru
        _
    $region20: #{convolutional_layer.2} parent=5 // pred_fallthru
      _
    %p112 = scmp.le.s32.totalorder 1, %s8
    %p113 = scmp.lt.s32.totalorder %s8, 3
    %p114 = pnand %p112, %p113
    %p115 = pneg %p114
    // Predicated region
    $region25: #{convolutional_layer.2} parent=5 // pred_check
      _
    $region26: #{convolutional_layer.2} parent=5 // pred_check_branch
      %117 = sbr.rel (%p114) target = $region28
    $region27: #{convolutional_layer.2} parent=5 // pred_region
      %s118 = ssub.s32 %s8, 1
      %s119 = smul.u32 32, %s13
      %p120 = scmp.lt.s32.totalorder %s119, 63
      %s121 = scalar_select %p120, %s119, 63
      %s122 = smul.addr %s121, 4
      %s123 = scalar_lea.vmem %s0, %s122
      %p124 = pneg %p34
      %p125 = pneg %p31
      %p126 = pneg %p55
      %p127 = pneg %p52
      %p128 = pneg %p81
      %p129 = pneg %p78
      %p130 = scmp.lt.s32.totalorder %s13, 1
      %s131 = scalar_select %p130, %s13, 1
      %s132 = smul.addr %s131, 2
      %s133 = scalar_lea.vmem %s2, %s132
      %s134 = smul.u32 32, %s13
      %p135 = scmp.lt.s32.totalorder %s134, 63
      %s136 = scalar_select %p135, %s134, 63
      %s137 = smul.addr %s136, 4
      %s138 = scalar_lea.vmem %s0, %s137
      %s139 = smul.u32 32, %s13
      %p140 = scmp.lt.s32.totalorder %s13, 1
      %s141 = scalar_select %p140, %s13, 1
      %s142 = smul.addr %s141, 2
      %s143 = scalar_lea.vmem %s2, %s142
      %v145 = vld [vmem:[%s138] sm:$0xf]
      %v146 = vld [vmem:[%s138 + $0x4] sm:$0xf]
      %v147 = vld [vmem:[%s138 + $0x8] sm:$0xf]
      %v148 = vld [vmem:[%s138 + $0xc] sm:$0xf]
      %v149 = vld [vmem:[%s138 + $0x10] sm:$0xf]
      %v150 = vld [vmem:[%s138 + $0x14] sm:$0xf]
      %v151 = vld [vmem:[%s138 + $0x18] sm:$0xf]
      %v152 = vld [vmem:[%s138 + $0x1c] sm:$0xf]
      %v153 = vld [vmem:[%s138 + $0x20] sm:$0xf]
      %v154 = vld [vmem:[%s138 + $0x24] sm:$0xf]
      %v155 = vld [vmem:[%s138 + $0x28] sm:$0xf]
      %v156 = vld [vmem:[%s138 + $0x2c] sm:$0xf]
      %v157 = vld [vmem:[%s138 + $0x30] sm:$0xf]
      %v158 = vld [vmem:[%s138 + $0x34] sm:$0xf]
      %v159 = vld [vmem:[%s138 + $0x38] sm:$0xf]
      %v160 = vld [vmem:[%s138 + $0x3c] sm:$0xf]
      %v161 = vld [vmem:[%s138 + $0x40] sm:$0xf]
      %v162 = vld [vmem:[%s138 + $0x44] sm:$0xf]
      %v163 = vld [vmem:[%s138 + $0x48] sm:$0xf]
      %v164 = vld [vmem:[%s138 + $0x4c] sm:$0xf]
      %v165 = vld [vmem:[%s138 + $0x50] sm:$0xf]
      %v166 = vld [vmem:[%s138 + $0x54] sm:$0xf]
      %v167 = vld [vmem:[%s138 + $0x58] sm:$0xf]
      %v168 = vld [vmem:[%s138 + $0x5c] sm:$0xf]
      %v169 = vld [vmem:[%s138 + $0x60] sm:$0xf]
      %v170 = vld [vmem:[%s138 + $0x64] sm:$0xf]
      %v171 = vld [vmem:[%s138 + $0x68] sm:$0xf]
      %v172 = vld [vmem:[%s138 + $0x6c] sm:$0xf]
      %v173 = vld [vmem:[%s138 + $0x70] sm:$0xf]
      %v174 = vld [vmem:[%s138 + $0x74] sm:$0xf]
      %v175 = vld [vmem:[%s138 + $0x78] sm:$0xf]
      %v176 = vld [vmem:[%s138 + $0x7c] sm:$0xf]
      %v177 = vld [vmem:[%s1] sm:$0xf]
      %v178 = vld [vmem:[%s1 + $0x4] sm:$0xf]
      %v179 = vld [vmem:[%s1 + $0x8] sm:$0xf]
      %v180 = vld [vmem:[%s1 + $0xc] sm:$0xf]
      %v181 = vld [vmem:[%s1 + $0x10] sm:$0x3]
      %v214 = vunpack.c.l.b16 %v145
      %v215 = vunpack.c.l.b16 %v146
      %v216 = vunpack.c.l.b16 %v147
      %v217 = vunpack.c.l.b16 %v148
      %v218 = vunpack.c.l.b16 %v149
      %v219 = vunpack.c.l.b16 %v150
      %v220 = vunpack.c.l.b16 %v151
      %v221 = vunpack.c.l.b16 %v152
      %v222 = vunpack.c.l.b16 %v153
      %v223 = vunpack.c.l.b16 %v154
      %v224 = vunpack.c.l.b16 %v155
      %v225 = vunpack.c.l.b16 %v156
      %v226 = vunpack.c.l.b16 %v157
      %v227 = vunpack.c.l.b16 %v158
      %v228 = vunpack.c.l.b16 %v159
      %v229 = vunpack.c.l.b16 %v160
      %v230 = vunpack.c.l.b16 %v161
      %v231 = vunpack.c.l.b16 %v162
      %v232 = vunpack.c.l.b16 %v163
      %v233 = vunpack.c.l.b16 %v164
      %v234 = vunpack.c.l.b16 %v165
      %v235 = vunpack.c.l.b16 %v166
      %v236 = vunpack.c.l.b16 %v167
      %v237 = vunpack.c.l.b16 %v168
      %v238 = vunpack.c.l.b16 %v169
      %v239 = vunpack.c.l.b16 %v170
      %v240 = vunpack.c.l.b16 %v171
      %v241 = vunpack.c.l.b16 %v172
      %v242 = vunpack.c.l.b16 %v173
      %v243 = vunpack.c.l.b16 %v174
      %v244 = vunpack.c.l.b16 %v175
      %v245 = vunpack.c.l.b16 %v176
      %v246 = vpack.c.b16 %v215, %v214
      %v247 = vpack.c.b16 %v217, %v216
      %v248 = vpack.c.b16 %v219, %v218
      %v249 = vpack.c.b16 %v221, %v220
      %v250 = vpack.c.b16 %v223, %v222
      %v251 = vpack.c.b16 %v225, %v224
      %v252 = vpack.c.b16 %v227, %v226
      %v253 = vpack.c.b16 %v229, %v228
      %v254 = vpack.c.b16 %v231, %v230
      %v255 = vpack.c.b16 %v233, %v232
      %v256 = vpack.c.b16 %v235, %v234
      %v257 = vpack.c.b16 %v237, %v236
      %v258 = vpack.c.b16 %v239, %v238
      %v259 = vpack.c.b16 %v241, %v240
      %v260 = vpack.c.b16 %v243, %v242
      %v261 = vpack.c.b16 %v245, %v244
      %v267 = vunpack.c.l.b16 %v177
      %v268 = vunpack.c.l.b16 %v178
      %v269 = vunpack.c.l.b16 %v179
      %v270 = vunpack.c.l.b16 %v180
      %v271 = vunpack.c.l.b16 %v181
      %v272 = vpack.c.b16 %v268, %v267
      %v273 = vpack.c.b16 %v270, %v269
      %v274 = vpack.c.b16 %v271, %v271
      %vm277 = vcmask 293888
      %v279 = vsel %vm277, %v246, 0
      %v282 = vsel %vm277, %v247, 0
      %v285 = vsel %vm277, %v248, 0
      %v288 = vsel %vm277, %v249, 0
      %v291 = vsel %vm277, %v250, 0
      %v294 = vsel %vm277, %v251, 0
      %v297 = vsel %vm277, %v252, 0
      %v300 = vsel %vm277, %v253, 0
      %v303 = vsel %vm277, %v254, 0
      %v306 = vsel %vm277, %v255, 0
      %v309 = vsel %vm277, %v256, 0
      %v312 = vsel %vm277, %v257, 0
      %v315 = vsel %vm277, %v258, 0
      %v318 = vsel %vm277, %v259, 0
      %v321 = vsel %vm277, %v260, 0
      %v324 = vsel %vm277, %v261, 0
      %vm326 = vcmask 1041408
      %v328 = vsel %vm326, %v274, 0
      %330 = vmatprep.subr.bf16.mxu0 0
      %331 = vmatpush1.bf16.msra.mxu0 0
      %332 = vmatprep.subr.bf16.mxu0 0
      %333 = vmatpush1.bf16.msra.mxu0 0
      %334 = vmatprep.subr.bf16.mxu0 0
      %335 = vmatpush1.bf16.msra.mxu0 0
      %336 = vmatprep.subr.bf16.mxu0 0
      %337 = vmatpush1.bf16.msra.mxu0 0
      %338 = vmatprep.subr.bf16.mxu0 0
      %339 = vmatpush1.bf16.msra.mxu0 0
      %340 = vmatprep.subr.bf16.mxu0 0
      %341 = vmatpush1.bf16.msra.mxu0 %v328
      %342 = vmatprep.subr.bf16.mxu0 0
      %343 = vmatpush1.bf16.msra.mxu0 %v273
      %344 = vmatprep.subr.bf16.mxu0 0
      %345 = vmatpush1.bf16.msra.mxu0 %v272
      %346 = vmatprep.subr.bf16.mxu0 0
      %347 = vmatpush2.bf16.msra.mxu0 0
      %348 = vmatprep.subr.bf16.mxu0 0
      %349 = vmatpush2.bf16.msra.mxu0 0
      %350 = vmatprep.subr.bf16.mxu0 0
      %351 = vmatpush2.bf16.msra.mxu0 0
      %352 = vmatprep.subr.bf16.mxu0 0
      %353 = vmatpush2.bf16.msra.mxu0 0
      %354 = vmatprep.subr.bf16.mxu0 0
      %355 = vmatpush2.bf16.msra.mxu0 0
      %356 = vmatprep.subr.bf16.mxu0 0
      %357 = vmatpush2.bf16.msra.mxu0 0
      %358 = vmatprep.subr.bf16.mxu0 0
      %359 = vmatpush2.bf16.msra.mxu0 0
      %360 = vmatprep.subr.bf16.mxu0 0
      %361 = vmatpush2.bf16.msra.mxu0 0
      %362 = vmatprep.mubr.bf16.mxu0 0
      %363 = vmatmul.mubr.bf16.gmra.mxu0 %v279
      %v364 = vpop.f32.mrf.mxu0
      %v365 = vadd.f32 0.0, %v364
      %v366 = vpop.f32.mrf.mxu0
      %v367 = vpop.f32.mrf.mxu0
      %v368 = vadd.f32 0.0, %v367
      %v369 = vpop.f32.mrf.mxu0
      %370 = vmatprep.mubr.bf16.mxu0 0
      %371 = vmatmul.mubr.bf16.gmra.mxu0 %v282
      %v372 = vpop.f32.mrf.mxu0
      %v373 = vadd.f32 0.0, %v372
      %v374 = vpop.f32.mrf.mxu0
      %v375 = vpop.f32.mrf.mxu0
      %v376 = vadd.f32 0.0, %v375
      %v377 = vpop.f32.mrf.mxu0
      %378 = vmatprep.mubr.bf16.mxu0 0
      %379 = vmatmul.mubr.bf16.gmra.mxu0 %v285
      %v380 = vpop.f32.mrf.mxu0
      %v381 = vadd.f32 0.0, %v380
      %v382 = vpop.f32.mrf.mxu0
      %v383 = vpop.f32.mrf.mxu0
      %v384 = vadd.f32 0.0, %v383
      %v385 = vpop.f32.mrf.mxu0
      %386 = vmatprep.mubr.bf16.mxu0 0
      %387 = vmatmul.mubr.bf16.gmra.mxu0 %v288
      %v388 = vpop.f32.mrf.mxu0
      %v389 = vadd.f32 0.0, %v388
      %v390 = vpop.f32.mrf.mxu0
      %v391 = vpop.f32.mrf.mxu0
      %v392 = vadd.f32 0.0, %v391
      %v393 = vpop.f32.mrf.mxu0
      %394 = vmatprep.mubr.bf16.mxu0 0
      %395 = vmatmul.mubr.bf16.gmra.mxu0 %v291
      %v396 = vpop.f32.mrf.mxu0
      %v397 = vadd.f32 0.0, %v396
      %v398 = vpop.f32.mrf.mxu0
      %v399 = vpop.f32.mrf.mxu0
      %v400 = vadd.f32 0.0, %v399
      %v401 = vpop.f32.mrf.mxu0
      %402 = vmatprep.mubr.bf16.mxu0 0
      %403 = vmatmul.mubr.bf16.gmra.mxu0 %v294
      %v404 = vpop.f32.mrf.mxu0
      %v405 = vadd.f32 0.0, %v404
      %v406 = vpop.f32.mrf.mxu0
      %v407 = vpop.f32.mrf.mxu0
      %v408 = vadd.f32 0.0, %v407
      %v409 = vpop.f32.mrf.mxu0
      %410 = vmatprep.mubr.bf16.mxu0 0
      %411 = vmatmul.mubr.bf16.gmra.mxu0 %v297
      %v412 = vpop.f32.mrf.mxu0
      %v413 = vadd.f32 0.0, %v412
      %v414 = vpop.f32.mrf.mxu0
      %v415 = vpop.f32.mrf.mxu0
      %v416 = vadd.f32 0.0, %v415
      %v417 = vpop.f32.mrf.mxu0
      %418 = vmatprep.mubr.bf16.mxu0 0
      %419 = vmatmul.mubr.bf16.gmra.mxu0 %v300
      %v420 = vpop.f32.mrf.mxu0
      %v421 = vadd.f32 0.0, %v420
      %v422 = vpop.f32.mrf.mxu0
      %v423 = vpop.f32.mrf.mxu0
      %v424 = vadd.f32 0.0, %v423
      %v425 = vpop.f32.mrf.mxu0
      %426 = vmatprep.mubr.bf16.mxu0 0
      %427 = vmatmul.mubr.bf16.gmra.mxu0 %v303
      %v428 = vpop.f32.mrf.mxu0
      %v429 = vadd.f32 0.0, %v428
      %v430 = vpop.f32.mrf.mxu0
      %v431 = vpop.f32.mrf.mxu0
      %v432 = vadd.f32 0.0, %v431
      %v433 = vpop.f32.mrf.mxu0
      %434 = vmatprep.mubr.bf16.mxu0 0
      %435 = vmatmul.mubr.bf16.gmra.mxu0 %v306
      %v436 = vpop.f32.mrf.mxu0
      %v437 = vadd.f32 0.0, %v436
      %v438 = vpop.f32.mrf.mxu0
      %v439 = vpop.f32.mrf.mxu0
      %v440 = vadd.f32 0.0, %v439
      %v441 = vpop.f32.mrf.mxu0
      %442 = vmatprep.mubr.bf16.mxu0 0
      %443 = vmatmul.mubr.bf16.gmra.mxu0 %v309
      %v444 = vpop.f32.mrf.mxu0
      %v445 = vadd.f32 0.0, %v444
      %v446 = vpop.f32.mrf.mxu0
      %v447 = vpop.f32.mrf.mxu0
      %v448 = vadd.f32 0.0, %v447
      %v449 = vpop.f32.mrf.mxu0
      %450 = vmatprep.mubr.bf16.mxu0 0
      %451 = vmatmul.mubr.bf16.gmra.mxu0 %v312
      %v452 = vpop.f32.mrf.mxu0
      %v453 = vadd.f32 0.0, %v452
      %v454 = vpop.f32.mrf.mxu0
      %v455 = vpop.f32.mrf.mxu0
      %v456 = vadd.f32 0.0, %v455
      %v457 = vpop.f32.mrf.mxu0
      %458 = vmatprep.mubr.bf16.mxu0 0
      %459 = vmatmul.mubr.bf16.gmra.mxu0 %v315
      %v460 = vpop.f32.mrf.mxu0
      %v461 = vadd.f32 0.0, %v460
      %v462 = vpop.f32.mrf.mxu0
      %v463 = vpop.f32.mrf.mxu0
      %v464 = vadd.f32 0.0, %v463
      %v465 = vpop.f32.mrf.mxu0
      %466 = vmatprep.mubr.bf16.mxu0 0
      %467 = vmatmul.mubr.bf16.gmra.mxu0 %v318
      %v468 = vpop.f32.mrf.mxu0
      %v469 = vadd.f32 0.0, %v468
      %v470 = vpop.f32.mrf.mxu0
      %v471 = vpop.f32.mrf.mxu0
      %v472 = vadd.f32 0.0, %v471
      %v473 = vpop.f32.mrf.mxu0
      %474 = vmatprep.mubr.bf16.mxu0 0
      %475 = vmatmul.mubr.bf16.gmra.mxu0 %v321
      %v476 = vpop.f32.mrf.mxu0
      %v477 = vadd.f32 0.0, %v476
      %v478 = vpop.f32.mrf.mxu0
      %v479 = vpop.f32.mrf.mxu0
      %v480 = vadd.f32 0.0, %v479
      %v481 = vpop.f32.mrf.mxu0
      %482 = vmatprep.mubr.bf16.mxu0 0
      %483 = vmatmul.mubr.bf16.gmra.mxu0 %v324
      %v484 = vpop.f32.mrf.mxu0
      %v485 = vadd.f32 0.0, %v484
      %v486 = vpop.f32.mrf.mxu0
      %v487 = vpop.f32.mrf.mxu0
      %v488 = vadd.f32 0.0, %v487
      %v489 = vpop.f32.mrf.mxu0
      %490 = vdwg.mxu0
      %v491 = vadd.f32 %v365, %v368
      %v492 = vadd.f32 %v491, %v373
      %v493 = vadd.f32 %v492, %v376
      %v494 = vadd.f32 %v493, %v381
      %v495 = vadd.f32 %v494, %v384
      %v496 = vadd.f32 %v495, %v389
      %v497 = vadd.f32 %v496, %v392
      %v498 = vadd.f32 %v497, %v397
      %v499 = vadd.f32 %v498, %v400
      %v500 = vadd.f32 %v499, %v405
      %v501 = vadd.f32 %v500, %v408
      %v502 = vadd.f32 %v501, %v413
      %v503 = vadd.f32 %v502, %v416
      %v504 = vadd.f32 %v503, %v421
      %v505 = vadd.f32 %v504, %v424
      %v506 = vadd.f32 %v505, %v429
      %v507 = vadd.f32 %v506, %v432
      %v508 = vadd.f32 %v507, %v437
      %v509 = vadd.f32 %v508, %v440
      %v510 = vadd.f32 %v509, %v445
      %v511 = vadd.f32 %v510, %v448
      %v512 = vadd.f32 %v511, %v453
      %v513 = vadd.f32 %v512, %v456
      %v514 = vadd.f32 %v513, %v461
      %v515 = vadd.f32 %v514, %v464
      %v516 = vadd.f32 %v515, %v469
      %v517 = vadd.f32 %v516, %v472
      %v518 = vadd.f32 %v517, %v477
      %v519 = vadd.f32 %v518, %v480
      %v520 = vadd.f32 %v519, %v485
      %v521 = vadd.f32 %v520, %v488
      %v522 = vrot.slane %v521, 4
      %v523 = vadd.f32 %v521, %v522
      %v524 = vrot.slane %v523, 2
      %v525 = vadd.f32 %v523, %v524
      %v526 = vrot.slane %v525, 1
      %v527 = vadd.f32 %v525, %v526
      %v528 = vmul.f32 %v365, %v365
      %v529 = vmul.f32 %v368, %v368
      %v530 = vmul.f32 %v373, %v373
      %v531 = vmul.f32 %v376, %v376
      %v532 = vmul.f32 %v381, %v381
      %v533 = vmul.f32 %v384, %v384
      %v534 = vmul.f32 %v389, %v389
      %v535 = vmul.f32 %v392, %v392
      %v536 = vmul.f32 %v397, %v397
      %v537 = vmul.f32 %v400, %v400
      %v538 = vmul.f32 %v405, %v405
      %v539 = vmul.f32 %v408, %v408
      %v540 = vmul.f32 %v413, %v413
      %v541 = vmul.f32 %v416, %v416
      %v542 = vmul.f32 %v421, %v421
      %v543 = vmul.f32 %v424, %v424
      %v544 = vmul.f32 %v429, %v429
      %v545 = vmul.f32 %v432, %v432
      %v546 = vmul.f32 %v437, %v437
      %v547 = vmul.f32 %v440, %v440
      %v548 = vmul.f32 %v445, %v445
      %v549 = vmul.f32 %v448, %v448
      %v550 = vmul.f32 %v453, %v453
      %v551 = vmul.f32 %v456, %v456
      %v552 = vmul.f32 %v461, %v461
      %v553 = vmul.f32 %v464, %v464
      %v554 = vmul.f32 %v469, %v469
      %v555 = vmul.f32 %v472, %v472
      %v556 = vmul.f32 %v477, %v477
      %v557 = vmul.f32 %v480, %v480
      %v558 = vmul.f32 %v485, %v485
      %v559 = vmul.f32 %v488, %v488
      %v560 = vadd.f32 %v528, %v529
      %v561 = vadd.f32 %v560, %v530
      %v562 = vadd.f32 %v561, %v531
      %v563 = vadd.f32 %v562, %v532
      %v564 = vadd.f32 %v563, %v533
      %v565 = vadd.f32 %v564, %v534
      %v566 = vadd.f32 %v565, %v535
      %v567 = vadd.f32 %v566, %v536
      %v568 = vadd.f32 %v567, %v537
      %v569 = vadd.f32 %v568, %v538
      %v570 = vadd.f32 %v569, %v539
      %v571 = vadd.f32 %v570, %v540
      %v572 = vadd.f32 %v571, %v541
      %v573 = vadd.f32 %v572, %v542
      %v574 = vadd.f32 %v573, %v543
      %v575 = vadd.f32 %v574, %v544
      %v576 = vadd.f32 %v575, %v545
      %v577 = vadd.f32 %v576, %v546
      %v578 = vadd.f32 %v577, %v547
      %v579 = vadd.f32 %v578, %v548
      %v580 = vadd.f32 %v579, %v549
      %v581 = vadd.f32 %v580, %v550
      %v582 = vadd.f32 %v581, %v551
      %v583 = vadd.f32 %v582, %v552
      %v584 = vadd.f32 %v583, %v553
      %v585 = vadd.f32 %v584, %v554
      %v586 = vadd.f32 %v585, %v555
      %v587 = vadd.f32 %v586, %v556
      %v588 = vadd.f32 %v587, %v557
      %v589 = vadd.f32 %v588, %v558
      %v590 = vadd.f32 %v589, %v559
      %v591 = vrot.slane %v590, 4
      %v592 = vadd.f32 %v590, %v591
      %v593 = vrot.slane %v592, 2
      %v594 = vadd.f32 %v592, %v593
      %v595 = vrot.slane %v594, 1
      %v596 = vadd.f32 %v594, %v595
      %vm597 = vcmask 1040384
      %v598 = vsel %vm597, %v527, %v596
      %599 = vst [vmem:[%s143] sm:$0x3] %v598
      %p600 = scmp.lt.s32.totalorder %s13, 1
      %s601 = scalar_select %p600, %s13, 1
      %s602 = smul.addr %s601, 2
      %s603 = scalar_lea.vmem %s2, %s602
      // Predicated region
      $region29: #{convolutional_layer.2} parent=27 // pred_check
        %p604 = pneg %p78
      $region30: #{convolutional_layer.2} parent=27 // pred_check_branch
        %606 = sbr.rel (%p604) target = $region32
      $region31: #{convolutional_layer.2} parent=27 // pred_region
        _
      $region32: #{convolutional_layer.2} parent=27 // pred_fallthru
        _
    $region28: #{convolutional_layer.2} parent=5 // pred_fallthru
      _
    %p607 = scmp.le.s32.totalorder 2, %s8
    // Predicated region
    $region33: #{convolutional_layer.2} parent=5 // pred_check
      %p608 = pneg %p607
    $region34: #{convolutional_layer.2} parent=5 // pred_check_branch
      %610 = sbr.rel (%p608) target = $region36
    $region35: #{convolutional_layer.2} parent=5 // pred_region
      %s611 = ssub.s32 %s8, 2
      // Predicated region
      $region37: #{convolutional_layer.2} parent=35 // pred_check
        %p612 = pneg %p84
      $region38: #{convolutional_layer.2} parent=35 // pred_check_branch
        %614 = sbr.rel (%p612) target = $region40
      $region39: #{convolutional_layer.2} parent=35 // pred_region
        %p615 = scmp.lt.s32.totalorder %s14, 1
        %s616 = scalar_select %p615, %s14, 1
        %s617 = smul.addr %s616, 2
        %s618 = scalar_lea.vmem %s2, %s617
      $region40: #{convolutional_layer.2} parent=35 // pred_fallthru
        _
    $region36: #{convolutional_layer.2} parent=5 // pred_fallthru
      _
  $region6: #{convolutional_layer.2} parent=0 // loop_footer
    %s12 = sadd.s32 1, %s8
  $region7: #{convolutional_layer.2} parent=0 // loop_footer_branch
    %7 = sbr.rel target = $region3
  $region8: #{convolutional_layer.2} parent=0 // loop_exit
    _

// kernel: convolutional_layer.3
$region0: #{convolutional_layer.3}
  #allocation0 [shape = 'u32[]', space=smem, size = 0x4, offset = 0x4, fixed_abs, tag = 'smem constant byte address 0x4 - core index']
  #allocation1 [shape = 'u32[144,128]{1,0:T(1,128)}', space=vmem, size = 0x12000, scoped, tag = 'internal scratch']
  %s0 = inlined_call_operand.vmem [shape: bf16[512,36], index: 0, kind: input, shape index: {}]
  %s1 = inlined_call_operand.vmem [shape: bf16[36,128], index: 1, kind: input, shape index: {}]
  %s2 = inlined_call_operand.vmem [shape: f32[1,128], index: 2, kind: input, shape index: {}]
  %s3 = inlined_call_operand.vmem [shape: f32[1,128], index: 3, kind: input, shape index: {}]
  %s4 = inlined_call_operand.vmem [shape: f32[512,128], index: 4, kind: output, shape index: {}]
  %s5 = sld [smem:[#allocation0]]
  $region49: #{convolutional_layer.3} parent=0
    _
  %s7 = ssub.s32 1, %s5
  %s8 = scalar_select 0, %s7, %s5
  loop: start=0, step=1, limit=4
  $region2: #{convolutional_layer.3} parent=0 // loop_pre_header
    _
  $region3: #{convolutional_layer.3} parent=0 // loop_header
    %s10 = sphi 0, %s14
    %p11 = scmp.ge.s32.totalorder %s10, 4
    %s20 = sphi 0, %s22
    %s23 = sphi 0, %s20
    %s24 = sphi 0, %s23
    %s40 = sphi 0, %s24
    %s44 = sphi 0, %s44
    %s46 = sphi 0, %s44
    %s47 = sphi 0, %s46
    %s61 = sphi 0, %s47
    %s65 = sphi 0, %s65
    %s67 = sphi 0, %s65
    %s68 = sphi 0, %s67
    %s82 = sphi 0, %s68
    %s86 = sphi 0, %s86
    %s88 = sphi 0, %s86
    %s89 = sphi 0, %s88
    %s103 = sphi 0, %s89
    %s109 = sphi 0, %s111
    %s112 = sphi 0, %s109
    %s113 = sphi 0, %s112
    %s129 = sphi 0, %s113
  $region4: #{convolutional_layer.3} parent=0 // loop_header_branch
    %13 = sbr.rel (%p11) target = $region8
  $region5: #{convolutional_layer.3} parent=0 // loop_body
    %s15 = ssub.s32 %s10, 1
    %s16 = ssub.s32 %s10, 2
    %s17 = sadd.s32 %s10, 1
    %s18 = ssub.s32 %s10, %s17
    %p19 = scmp.eq.s32.totalorder %s18, 0
    %s21 = sadd.s32 %s20, 1
    %s22 = scalar_select %p19, %s20, %s21
    %p25 = pneg %p19
    %p26 = scmp.eq.s32.totalorder %s10, 1
    %p27 = por %p25, %p26
    %p28 = scmp.ne.s32.totalorder %s20, %s23
    %p29 = scmp.eq.s32.totalorder %s10, 0
    %p30 = por %p28, %p29
    %p31 = scmp.ne.s32.totalorder %s20, %s23
    %p32 = scmp.eq.s32.totalorder %s15, 1
    %p33 = por %p31, %p32
    %p34 = scmp.ne.s32.totalorder %s23, %s24
    %p35 = scmp.eq.s32.totalorder %s15, 0
    %p36 = por %p34, %p35
    %p37 = scmp.ne.s32.totalorder %s23, %s24
    %p38 = scmp.eq.s32.totalorder %s16, 1
    %p39 = por %p37, %p38
    %p41 = scmp.ne.s32.totalorder %s24, %s40
    %p42 = scmp.eq.s32.totalorder %s16, 0
    %p43 = por %p41, %p42
    %s45 = sadd.s32 %s44, 1
    %p48 = scmp.eq.s32.totalorder %s10, 1
    %p49 = scmp.ne.s32.totalorder %s44, %s46
    %p50 = scmp.eq.s32.totalorder %s10, 0
    %p51 = por %p49, %p50
    %p52 = scmp.ne.s32.totalorder %s44, %s46
    %p53 = scmp.eq.s32.totalorder %s15, 1
    %p54 = por %p52, %p53
    %p55 = scmp.ne.s32.totalorder %s46, %s47
    %p56 = scmp.eq.s32.totalorder %s15, 0
    %p57 = por %p55, %p56
    %p58 = scmp.ne.s32.totalorder %s46, %s47
    %p59 = scmp.eq.s32.totalorder %s16, 1
    %p60 = por %p58, %p59
    %p62 = scmp.ne.s32.totalorder %s47, %s61
    %p63 = scmp.eq.s32.totalorder %s16, 0
    %p64 = por %p62, %p63
    %s66 = sadd.s32 %s65, 1
    %p69 = scmp.eq.s32.totalorder %s10, 1
    %p70 = scmp.ne.s32.totalorder %s65, %s67
    %p71 = scmp.eq.s32.totalorder %s10, 0
    %p72 = por %p70, %p71
    %p73 = scmp.ne.s32.totalorder %s65, %s67
    %p74 = scmp.eq.s32.totalorder %s15, 1
    %p75 = por %p73, %p74
    %p76 = scmp.ne.s32.totalorder %s67, %s68
    %p77 = scmp.eq.s32.totalorder %s15, 0
    %p78 = por %p76, %p77
    %p79 = scmp.ne.s32.totalorder %s67, %s68
    %p80 = scmp.eq.s32.totalorder %s16, 1
    %p81 = por %p79, %p80
    %p83 = scmp.ne.s32.totalorder %s68, %s82
    %p84 = scmp.eq.s32.totalorder %s16, 0
    %p85 = por %p83, %p84
    %s87 = sadd.s32 %s86, 1
    %p90 = scmp.eq.s32.totalorder %s10, 1
    %p91 = scmp.ne.s32.totalorder %s86, %s88
    %p92 = scmp.eq.s32.totalorder %s10, 0
    %p93 = por %p91, %p92
    %p94 = scmp.ne.s32.totalorder %s86, %s88
    %p95 = scmp.eq.s32.totalorder %s15, 1
    %p96 = por %p94, %p95
    %p97 = scmp.ne.s32.totalorder %s88, %s89
    %p98 = scmp.eq.s32.totalorder %s15, 0
    %p99 = por %p97, %p98
    %p100 = scmp.ne.s32.totalorder %s88, %s89
    %p101 = scmp.eq.s32.totalorder %s16, 1
    %p102 = por %p100, %p101
    %p104 = scmp.ne.s32.totalorder %s89, %s103
    %p105 = scmp.eq.s32.totalorder %s16, 0
    %p106 = por %p104, %p105
    %s107 = ssub.s32 %s10, %s17
    %p108 = scmp.eq.s32.totalorder %s107, 0
    %s110 = sadd.s32 %s109, 1
    %s111 = scalar_select %p108, %s109, %s110
    %p114 = pneg %p108
    %p115 = scmp.eq.s32.totalorder %s10, 1
    %p116 = por %p114, %p115
    %p117 = scmp.ne.s32.totalorder %s109, %s112
    %p118 = scmp.eq.s32.totalorder %s10, 0
    %p119 = por %p117, %p118
    %p120 = scmp.ne.s32.totalorder %s109, %s112
    %p121 = scmp.eq.s32.totalorder %s15, 1
    %p122 = por %p120, %p121
    %p123 = scmp.ne.s32.totalorder %s112, %s113
    %p124 = scmp.eq.s32.totalorder %s15, 0
    %p125 = por %p123, %p124
    %p126 = scmp.ne.s32.totalorder %s112, %s113
    %p127 = scmp.eq.s32.totalorder %s16, 1
    %p128 = por %p126, %p127
    %p130 = scmp.ne.s32.totalorder %s113, %s129
    %p131 = scmp.eq.s32.totalorder %s16, 0
    %p132 = por %p130, %p131
    %p133 = scmp.le.s32.totalorder 1, %s10
    %p134 = scmp.lt.s32.totalorder %s10, 3
    %p135 = pnand %p133, %p134
    %p136 = pneg %p135
    // Predicated region
    $region9: #{convolutional_layer.3} parent=5 // pred_check
      _
    $region10: #{convolutional_layer.3} parent=5 // pred_check_branch
      %138 = sbr.rel (%p135) target = $region12
    $region11: #{convolutional_layer.3} parent=5 // pred_region
      %s139 = ssub.s32 %s10, 1
      // Predicated region
      $region13: #{convolutional_layer.3} parent=11 // pred_check
        %p140 = pneg %p57
      $region14: #{convolutional_layer.3} parent=11 // pred_check_branch
        %142 = sbr.rel (%p140) target = $region16
      $region15: #{convolutional_layer.3} parent=11 // pred_region
        _
      $region16: #{convolutional_layer.3} parent=11 // pred_fallthru
        _
      // Predicated region
      $region17: #{convolutional_layer.3} parent=11 // pred_check
        %p143 = pneg %p78
      $region18: #{convolutional_layer.3} parent=11 // pred_check_branch
        %145 = sbr.rel (%p143) target = $region20
      $region19: #{convolutional_layer.3} parent=11 // pred_region
        _
      $region20: #{convolutional_layer.3} parent=11 // pred_fallthru
        _
      // Predicated region
      $region21: #{convolutional_layer.3} parent=11 // pred_check
        %p146 = pneg %p99
      $region22: #{convolutional_layer.3} parent=11 // pred_check_branch
        %148 = sbr.rel (%p146) target = $region24
      $region23: #{convolutional_layer.3} parent=11 // pred_region
        _
      $region24: #{convolutional_layer.3} parent=11 // pred_fallthru
        _
    $region12: #{convolutional_layer.3} parent=5 // pred_fallthru
      _
    %p149 = scmp.lt.s32.totalorder %s10, 2
    // Predicated region
    $region25: #{convolutional_layer.3} parent=5 // pred_check
      %p150 = pneg %p149
    $region26: #{convolutional_layer.3} parent=5 // pred_check_branch
      %152 = sbr.rel (%p150) target = $region28
    $region27: #{convolutional_layer.3} parent=5 // pred_region
      // Predicated region
      $region29: #{convolutional_layer.3} parent=27 // pred_check
        %p153 = pneg %p30
      $region30: #{convolutional_layer.3} parent=27 // pred_check_branch
        %155 = sbr.rel (%p153) target = $region32
      $region31: #{convolutional_layer.3} parent=27 // pred_region
        %s156 = smul.u32 32, %s10
        %p157 = scmp.lt.s32.totalorder %s156, 63
        %s158 = scalar_select %p157, %s156, 63
        %s159 = smul.addr %s158, 4
        %s160 = scalar_lea.vmem %s0, %s159
        %s161 = smul.u32 32, %s10
      $region32: #{convolutional_layer.3} parent=27 // pred_fallthru
        _
    $region28: #{convolutional_layer.3} parent=5 // pred_fallthru
      _
    %p162 = scmp.le.s32.totalorder 1, %s10
    %p163 = scmp.lt.s32.totalorder %s10, 3
    %p164 = pnand %p162, %p163
    %p165 = pneg %p164
    // Predicated region
    $region33: #{convolutional_layer.3} parent=5 // pred_check
      _
    $region34: #{convolutional_layer.3} parent=5 // pred_check_branch
      %167 = sbr.rel (%p164) target = $region36
    $region35: #{convolutional_layer.3} parent=5 // pred_region
      %s168 = ssub.s32 %s10, 1
      %s169 = smul.u32 32, %s15
      %p170 = scmp.lt.s32.totalorder %s169, 63
      %s171 = scalar_select %p170, %s169, 63
      %s172 = smul.addr %s171, 4
      %s173 = scalar_lea.vmem %s0, %s172
      %p174 = pneg %p36
      %p175 = pneg %p33
      %p176 = pneg %p57
      %p177 = pneg %p54
      %p178 = pneg %p78
      %p179 = pneg %p75
      %p180 = pneg %p99
      %p181 = pneg %p96
      %p182 = pneg %p125
      %p183 = pneg %p122
      %s184 = smul.u32 32, %s15
      %p185 = scmp.lt.s32.totalorder %s184, 63
      %s186 = scalar_select %p185, %s184, 63
      %s187 = smul.addr %s186, 8
      %s188 = scalar_lea.vmem %s4, %s187
      %s189 = smul.u32 32, %s15
      %p190 = scmp.lt.s32.totalorder %s189, 63
      %s191 = scalar_select %p190, %s189, 63
      %s192 = smul.addr %s191, 4
      %s193 = scalar_lea.vmem %s0, %s192
      %s194 = smul.u32 32, %s15
      %s195 = smul.u32 32, %s15
      %p196 = scmp.lt.s32.totalorder %s195, 63
      %s197 = scalar_select %p196, %s195, 63
      %s198 = smul.addr %s197, 8
      %s199 = scalar_lea.vmem %s4, %s198
      %s200 = smul.u32 32, %s15
      %v202 = vld [vmem:[%s193] sm:$0xf]
      %v203 = vld [vmem:[%s193 + $0x4] sm:$0xf]
      %v204 = vld [vmem:[%s193 + $0x8] sm:$0xf]
      %v205 = vld [vmem:[%s193 + $0xc] sm:$0xf]
      %v206 = vld [vmem:[%s193 + $0x10] sm:$0xf]
      %v207 = vld [vmem:[%s193 + $0x14] sm:$0xf]
      %v208 = vld [vmem:[%s193 + $0x18] sm:$0xf]
      %v209 = vld [vmem:[%s193 + $0x1c] sm:$0xf]
      %v210 = vld [vmem:[%s193 + $0x20] sm:$0xf]
      %v211 = vld [vmem:[%s193 + $0x24] sm:$0xf]
      %v212 = vld [vmem:[%s193 + $0x28] sm:$0xf]
      %v213 = vld [vmem:[%s193 + $0x2c] sm:$0xf]
      %v214 = vld [vmem:[%s193 + $0x30] sm:$0xf]
      %v215 = vld [vmem:[%s193 + $0x34] sm:$0xf]
      %v216 = vld [vmem:[%s193 + $0x38] sm:$0xf]
      %v217 = vld [vmem:[%s193 + $0x3c] sm:$0xf]
      %v218 = vld [vmem:[%s193 + $0x40] sm:$0xf]
      %v219 = vld [vmem:[%s193 + $0x44] sm:$0xf]
      %v220 = vld [vmem:[%s193 + $0x48] sm:$0xf]
      %v221 = vld [vmem:[%s193 + $0x4c] sm:$0xf]
      %v222 = vld [vmem:[%s193 + $0x50] sm:$0xf]
      %v223 = vld [vmem:[%s193 + $0x54] sm:$0xf]
      %v224 = vld [vmem:[%s193 + $0x58] sm:$0xf]
      %v225 = vld [vmem:[%s193 + $0x5c] sm:$0xf]
      %v226 = vld [vmem:[%s193 + $0x60] sm:$0xf]
      %v227 = vld [vmem:[%s193 + $0x64] sm:$0xf]
      %v228 = vld [vmem:[%s193 + $0x68] sm:$0xf]
      %v229 = vld [vmem:[%s193 + $0x6c] sm:$0xf]
      %v230 = vld [vmem:[%s193 + $0x70] sm:$0xf]
      %v231 = vld [vmem:[%s193 + $0x74] sm:$0xf]
      %v232 = vld [vmem:[%s193 + $0x78] sm:$0xf]
      %v233 = vld [vmem:[%s193 + $0x7c] sm:$0xf]
      %v234 = vld [vmem:[%s1] sm:$0xf]
      %v235 = vld [vmem:[%s1 + $0x4] sm:$0xf]
      %v236 = vld [vmem:[%s1 + $0x8] sm:$0xf]
      %v237 = vld [vmem:[%s1 + $0xc] sm:$0xf]
      %v238 = vld [vmem:[%s1 + $0x10] sm:$0x3]
      %v271 = vunpack.c.l.b16 %v202
      %v272 = vunpack.c.l.b16 %v203
      %v273 = vunpack.c.l.b16 %v204
      %v274 = vunpack.c.l.b16 %v205
      %v275 = vunpack.c.l.b16 %v206
      %v276 = vunpack.c.l.b16 %v207
      %v277 = vunpack.c.l.b16 %v208
      %v278 = vunpack.c.l.b16 %v209
      %v279 = vunpack.c.l.b16 %v210
      %v280 = vunpack.c.l.b16 %v211
      %v281 = vunpack.c.l.b16 %v212
      %v282 = vunpack.c.l.b16 %v213
      %v283 = vunpack.c.l.b16 %v214
      %v284 = vunpack.c.l.b16 %v215
      %v285 = vunpack.c.l.b16 %v216
      %v286 = vunpack.c.l.b16 %v217
      %v287 = vunpack.c.l.b16 %v218
      %v288 = vunpack.c.l.b16 %v219
      %v289 = vunpack.c.l.b16 %v220
      %v290 = vunpack.c.l.b16 %v221
      %v291 = vunpack.c.l.b16 %v222
      %v292 = vunpack.c.l.b16 %v223
      %v293 = vunpack.c.l.b16 %v224
      %v294 = vunpack.c.l.b16 %v225
      %v295 = vunpack.c.l.b16 %v226
      %v296 = vunpack.c.l.b16 %v227
      %v297 = vunpack.c.l.b16 %v228
      %v298 = vunpack.c.l.b16 %v229
      %v299 = vunpack.c.l.b16 %v230
      %v300 = vunpack.c.l.b16 %v231
      %v301 = vunpack.c.l.b16 %v232
      %v302 = vunpack.c.l.b16 %v233
      %v303 = vpack.c.b16 %v272, %v271
      %v304 = vpack.c.b16 %v274, %v273
      %v305 = vpack.c.b16 %v276, %v275
      %v306 = vpack.c.b16 %v278, %v277
      %v307 = vpack.c.b16 %v280, %v279
      %v308 = vpack.c.b16 %v282, %v281
      %v309 = vpack.c.b16 %v284, %v283
      %v310 = vpack.c.b16 %v286, %v285
      %v311 = vpack.c.b16 %v288, %v287
      %v312 = vpack.c.b16 %v290, %v289
      %v313 = vpack.c.b16 %v292, %v291
      %v314 = vpack.c.b16 %v294, %v293
      %v315 = vpack.c.b16 %v296, %v295
      %v316 = vpack.c.b16 %v298, %v297
      %v317 = vpack.c.b16 %v300, %v299
      %v318 = vpack.c.b16 %v302, %v301
      %v324 = vunpack.c.l.b16 %v234
      %v325 = vunpack.c.l.b16 %v235
      %v326 = vunpack.c.l.b16 %v236
      %v327 = vunpack.c.l.b16 %v237
      %v328 = vunpack.c.l.b16 %v238
      %v329 = vpack.c.b16 %v325, %v324
      %v330 = vpack.c.b16 %v327, %v326
      %v331 = vpack.c.b16 %v328, %v328
      %vm334 = vcmask 293888
      %v336 = vsel %vm334, %v303, 0
      %v339 = vsel %vm334, %v304, 0
      %v342 = vsel %vm334, %v305, 0
      %v345 = vsel %vm334, %v306, 0
      %v348 = vsel %vm334, %v307, 0
      %v351 = vsel %vm334, %v308, 0
      %v354 = vsel %vm334, %v309, 0
      %v357 = vsel %vm334, %v310, 0
      %v360 = vsel %vm334, %v311, 0
      %v363 = vsel %vm334, %v312, 0
      %v366 = vsel %vm334, %v313, 0
      %v369 = vsel %vm334, %v314, 0
      %v372 = vsel %vm334, %v315, 0
      %v375 = vsel %vm334, %v316, 0
      %v378 = vsel %vm334, %v317, 0
      %v381 = vsel %vm334, %v318, 0
      %vm383 = vcmask 1041408
      %v385 = vsel %vm383, %v331, 0
      %387 = vmatprep.subr.bf16.mxu0 0
      %388 = vmatpush1.bf16.msra.mxu0 0
      %389 = vmatprep.subr.bf16.mxu0 0
      %390 = vmatpush1.bf16.msra.mxu0 0
      %391 = vmatprep.subr.bf16.mxu0 0
      %392 = vmatpush1.bf16.msra.mxu0 0
      %393 = vmatprep.subr.bf16.mxu0 0
      %394 = vmatpush1.bf16.msra.mxu0 0
      %395 = vmatprep.subr.bf16.mxu0 0
      %396 = vmatpush1.bf16.msra.mxu0 0
      %397 = vmatprep.subr.bf16.mxu0 0
      %398 = vmatpush1.bf16.msra.mxu0 %v385
      %399 = vmatprep.subr.bf16.mxu0 0
      %400 = vmatpush1.bf16.msra.mxu0 %v330
      %401 = vmatprep.subr.bf16.mxu0 0
      %402 = vmatpush1.bf16.msra.mxu0 %v329
      %403 = vmatprep.subr.bf16.mxu0 0
      %404 = vmatpush2.bf16.msra.mxu0 0
      %405 = vmatprep.subr.bf16.mxu0 0
      %406 = vmatpush2.bf16.msra.mxu0 0
      %407 = vmatprep.subr.bf16.mxu0 0
      %408 = vmatpush2.bf16.msra.mxu0 0
      %409 = vmatprep.subr.bf16.mxu0 0
      %410 = vmatpush2.bf16.msra.mxu0 0
      %411 = vmatprep.subr.bf16.mxu0 0
      %412 = vmatpush2.bf16.msra.mxu0 0
      %413 = vmatprep.subr.bf16.mxu0 0
      %414 = vmatpush2.bf16.msra.mxu0 0
      %415 = vmatprep.subr.bf16.mxu0 0
      %416 = vmatpush2.bf16.msra.mxu0 0
      %417 = vmatprep.subr.bf16.mxu0 0
      %418 = vmatpush2.bf16.msra.mxu0 0
      %419 = vmatprep.mubr.bf16.mxu0 0
      %420 = vmatmul.mubr.bf16.gmra.mxu0 %v336
      %v421 = vpop.f32.mrf.mxu0
      %v422 = vadd.f32 0.0, %v421
      %v423 = vpop.f32.mrf.mxu0
      %v424 = vpop.f32.mrf.mxu0
      %v425 = vadd.f32 0.0, %v424
      %v426 = vpop.f32.mrf.mxu0
      %427 = vmatprep.mubr.bf16.mxu0 0
      %428 = vmatmul.mubr.bf16.gmra.mxu0 %v339
      %v429 = vpop.f32.mrf.mxu0
      %v430 = vadd.f32 0.0, %v429
      %v431 = vpop.f32.mrf.mxu0
      %v432 = vpop.f32.mrf.mxu0
      %v433 = vadd.f32 0.0, %v432
      %v434 = vpop.f32.mrf.mxu0
      %435 = vmatprep.mubr.bf16.mxu0 0
      %436 = vmatmul.mubr.bf16.gmra.mxu0 %v342
      %v437 = vpop.f32.mrf.mxu0
      %v438 = vadd.f32 0.0, %v437
      %v439 = vpop.f32.mrf.mxu0
      %v440 = vpop.f32.mrf.mxu0
      %v441 = vadd.f32 0.0, %v440
      %v442 = vpop.f32.mrf.mxu0
      %443 = vmatprep.mubr.bf16.mxu0 0
      %444 = vmatmul.mubr.bf16.gmra.mxu0 %v345
      %v445 = vpop.f32.mrf.mxu0
      %v446 = vadd.f32 0.0, %v445
      %v447 = vpop.f32.mrf.mxu0
      %v448 = vpop.f32.mrf.mxu0
      %v449 = vadd.f32 0.0, %v448
      %v450 = vpop.f32.mrf.mxu0
      %451 = vmatprep.mubr.bf16.mxu0 0
      %452 = vmatmul.mubr.bf16.gmra.mxu0 %v348
      %v453 = vpop.f32.mrf.mxu0
      %v454 = vadd.f32 0.0, %v453
      %v455 = vpop.f32.mrf.mxu0
      %v456 = vpop.f32.mrf.mxu0
      %v457 = vadd.f32 0.0, %v456
      %v458 = vpop.f32.mrf.mxu0
      %459 = vmatprep.mubr.bf16.mxu0 0
      %460 = vmatmul.mubr.bf16.gmra.mxu0 %v351
      %v461 = vpop.f32.mrf.mxu0
      %v462 = vadd.f32 0.0, %v461
      %v463 = vpop.f32.mrf.mxu0
      %v464 = vpop.f32.mrf.mxu0
      %v465 = vadd.f32 0.0, %v464
      %v466 = vpop.f32.mrf.mxu0
      %467 = vmatprep.mubr.bf16.mxu0 0
      %468 = vmatmul.mubr.bf16.gmra.mxu0 %v354
      %v469 = vpop.f32.mrf.mxu0
      %v470 = vadd.f32 0.0, %v469
      %v471 = vpop.f32.mrf.mxu0
      %v472 = vpop.f32.mrf.mxu0
      %v473 = vadd.f32 0.0, %v472
      %v474 = vpop.f32.mrf.mxu0
      %475 = vmatprep.mubr.bf16.mxu0 0
      %476 = vmatmul.mubr.bf16.gmra.mxu0 %v357
      %v477 = vpop.f32.mrf.mxu0
      %v478 = vadd.f32 0.0, %v477
      %v479 = vpop.f32.mrf.mxu0
      %v480 = vpop.f32.mrf.mxu0
      %v481 = vadd.f32 0.0, %v480
      %v482 = vpop.f32.mrf.mxu0
      %483 = vmatprep.mubr.bf16.mxu0 0
      %484 = vmatmul.mubr.bf16.gmra.mxu0 %v360
      %v485 = vpop.f32.mrf.mxu0
      %v486 = vadd.f32 0.0, %v485
      %v487 = vpop.f32.mrf.mxu0
      %v488 = vpop.f32.mrf.mxu0
      %v489 = vadd.f32 0.0, %v488
      %v490 = vpop.f32.mrf.mxu0
      %491 = vmatprep.mubr.bf16.mxu0 0
      %492 = vmatmul.mubr.bf16.gmra.mxu0 %v363
      %v493 = vpop.f32.mrf.mxu0
      %v494 = vadd.f32 0.0, %v493
      %v495 = vpop.f32.mrf.mxu0
      %v496 = vpop.f32.mrf.mxu0
      %v497 = vadd.f32 0.0, %v496
      %v498 = vpop.f32.mrf.mxu0
      %499 = vmatprep.mubr.bf16.mxu0 0
      %500 = vmatmul.mubr.bf16.gmra.mxu0 %v366
      %v501 = vpop.f32.mrf.mxu0
      %v502 = vadd.f32 0.0, %v501
      %v503 = vpop.f32.mrf.mxu0
      %v504 = vpop.f32.mrf.mxu0
      %v505 = vadd.f32 0.0, %v504
      %v506 = vpop.f32.mrf.mxu0
      %507 = vmatprep.mubr.bf16.mxu0 0
      %508 = vmatmul.mubr.bf16.gmra.mxu0 %v369
      %v509 = vpop.f32.mrf.mxu0
      %v510 = vadd.f32 0.0, %v509
      %v511 = vpop.f32.mrf.mxu0
      %v512 = vpop.f32.mrf.mxu0
      %v513 = vadd.f32 0.0, %v512
      %v514 = vpop.f32.mrf.mxu0
      %515 = vmatprep.mubr.bf16.mxu0 0
      %516 = vmatmul.mubr.bf16.gmra.mxu0 %v372
      %v517 = vpop.f32.mrf.mxu0
      %v518 = vadd.f32 0.0, %v517
      %v519 = vpop.f32.mrf.mxu0
      %v520 = vpop.f32.mrf.mxu0
      %v521 = vadd.f32 0.0, %v520
      %v522 = vpop.f32.mrf.mxu0
      %523 = vmatprep.mubr.bf16.mxu0 0
      %524 = vmatmul.mubr.bf16.gmra.mxu0 %v375
      %v525 = vpop.f32.mrf.mxu0
      %v526 = vadd.f32 0.0, %v525
      %v527 = vpop.f32.mrf.mxu0
      %v528 = vpop.f32.mrf.mxu0
      %v529 = vadd.f32 0.0, %v528
      %v530 = vpop.f32.mrf.mxu0
      %531 = vmatprep.mubr.bf16.mxu0 0
      %532 = vmatmul.mubr.bf16.gmra.mxu0 %v378
      %v533 = vpop.f32.mrf.mxu0
      %v534 = vadd.f32 0.0, %v533
      %v535 = vpop.f32.mrf.mxu0
      %v536 = vpop.f32.mrf.mxu0
      %v537 = vadd.f32 0.0, %v536
      %v538 = vpop.f32.mrf.mxu0
      %539 = vmatprep.mubr.bf16.mxu0 0
      %540 = vmatmul.mubr.bf16.gmra.mxu0 %v381
      %v541 = vpop.f32.mrf.mxu0
      %v542 = vadd.f32 0.0, %v541
      %v543 = vpop.f32.mrf.mxu0
      %v544 = vpop.f32.mrf.mxu0
      %v545 = vadd.f32 0.0, %v544
      %v546 = vpop.f32.mrf.mxu0
      %547 = vdwg.mxu0
      %v548 = vld [vmem:[%s2] sm:$0x1]
      %v550 = vlaneseq
      %v551 = vshrl.u32 %v550, 7
      %v552 = vsub.s32 0, %v551
      %v553 = vrot.slane %v548, %v552
      %v555 = vmul.f32 %v422, %v553
      %v556 = vmul.f32 %v425, %v553
      %v557 = vmul.f32 %v430, %v553
      %v558 = vmul.f32 %v433, %v553
      %v559 = vmul.f32 %v438, %v553
      %v560 = vmul.f32 %v441, %v553
      %v561 = vmul.f32 %v446, %v553
      %v562 = vmul.f32 %v449, %v553
      %v563 = vmul.f32 %v454, %v553
      %v564 = vmul.f32 %v457, %v553
      %v565 = vmul.f32 %v462, %v553
      %v566 = vmul.f32 %v465, %v553
      %v567 = vmul.f32 %v470, %v553
      %v568 = vmul.f32 %v473, %v553
      %v569 = vmul.f32 %v478, %v553
      %v570 = vmul.f32 %v481, %v553
      %v571 = vmul.f32 %v486, %v553
      %v572 = vmul.f32 %v489, %v553
      %v573 = vmul.f32 %v494, %v553
      %v574 = vmul.f32 %v497, %v553
      %v575 = vmul.f32 %v502, %v553
      %v576 = vmul.f32 %v505, %v553
      %v577 = vmul.f32 %v510, %v553
      %v578 = vmul.f32 %v513, %v553
      %v579 = vmul.f32 %v518, %v553
      %v580 = vmul.f32 %v521, %v553
      %v581 = vmul.f32 %v526, %v553
      %v582 = vmul.f32 %v529, %v553
      %v583 = vmul.f32 %v534, %v553
      %v584 = vmul.f32 %v537, %v553
      %v585 = vmul.f32 %v542, %v553
      %v586 = vmul.f32 %v545, %v553
      %v587 = vld [vmem:[%s3] sm:$0x1]
      %v589 = vlaneseq
      %v590 = vshrl.u32 %v589, 7
      %v591 = vsub.s32 0, %v590
      %v592 = vrot.slane %v587, %v591
      %v594 = vadd.f32 %v555, %v592
      %v595 = vadd.f32 %v556, %v592
      %v596 = vadd.f32 %v557, %v592
      %v597 = vadd.f32 %v558, %v592
      %v598 = vadd.f32 %v559, %v592
      %v599 = vadd.f32 %v560, %v592
      %v600 = vadd.f32 %v561, %v592
      %v601 = vadd.f32 %v562, %v592
      %v602 = vadd.f32 %v563, %v592
      %v603 = vadd.f32 %v564, %v592
      %v604 = vadd.f32 %v565, %v592
      %v605 = vadd.f32 %v566, %v592
      %v606 = vadd.f32 %v567, %v592
      %v607 = vadd.f32 %v568, %v592
      %v608 = vadd.f32 %v569, %v592
      %v609 = vadd.f32 %v570, %v592
      %v610 = vadd.f32 %v571, %v592
      %v611 = vadd.f32 %v572, %v592
      %v612 = vadd.f32 %v573, %v592
      %v613 = vadd.f32 %v574, %v592
      %v614 = vadd.f32 %v575, %v592
      %v615 = vadd.f32 %v576, %v592
      %v616 = vadd.f32 %v577, %v592
      %v617 = vadd.f32 %v578, %v592
      %v618 = vadd.f32 %v579, %v592
      %v619 = vadd.f32 %v580, %v592
      %v620 = vadd.f32 %v581, %v592
      %v621 = vadd.f32 %v582, %v592
      %v622 = vadd.f32 %v583, %v592
      %v623 = vadd.f32 %v584, %v592
      %v624 = vadd.f32 %v585, %v592
      %v625 = vadd.f32 %v586, %v592
      %vm626 = vcmp.ge.f32.partialorder %v594, 0.0
      %vm627 = vcmp.ge.f32.partialorder %v595, 0.0
      %vm628 = vcmp.ge.f32.partialorder %v596, 0.0
      %vm629 = vcmp.ge.f32.partialorder %v597, 0.0
      %vm630 = vcmp.ge.f32.partialorder %v598, 0.0
      %vm631 = vcmp.ge.f32.partialorder %v599, 0.0
      %vm632 = vcmp.ge.f32.partialorder %v600, 0.0
      %vm633 = vcmp.ge.f32.partialorder %v601, 0.0
      %vm634 = vcmp.ge.f32.partialorder %v602, 0.0
      %vm635 = vcmp.ge.f32.partialorder %v603, 0.0
      %vm636 = vcmp.ge.f32.partialorder %v604, 0.0
      %vm637 = vcmp.ge.f32.partialorder %v605, 0.0
      %vm638 = vcmp.ge.f32.partialorder %v606, 0.0
      %vm639 = vcmp.ge.f32.partialorder %v607, 0.0
      %vm640 = vcmp.ge.f32.partialorder %v608, 0.0
      %vm641 = vcmp.ge.f32.partialorder %v609, 0.0
      %vm642 = vcmp.ge.f32.partialorder %v610, 0.0
      %vm643 = vcmp.ge.f32.partialorder %v611, 0.0
      %vm644 = vcmp.ge.f32.partialorder %v612, 0.0
      %vm645 = vcmp.ge.f32.partialorder %v613, 0.0
      %vm646 = vcmp.ge.f32.partialorder %v614, 0.0
      %vm647 = vcmp.ge.f32.partialorder %v615, 0.0
      %vm648 = vcmp.ge.f32.partialorder %v616, 0.0
      %vm649 = vcmp.ge.f32.partialorder %v617, 0.0
      %vm650 = vcmp.ge.f32.partialorder %v618, 0.0
      %vm651 = vcmp.ge.f32.partialorder %v619, 0.0
      %vm652 = vcmp.ge.f32.partialorder %v620, 0.0
      %vm653 = vcmp.ge.f32.partialorder %v621, 0.0
      %vm654 = vcmp.ge.f32.partialorder %v622, 0.0
      %vm655 = vcmp.ge.f32.partialorder %v623, 0.0
      %vm656 = vcmp.ge.f32.partialorder %v624, 0.0
      %vm657 = vcmp.ge.f32.partialorder %v625, 0.0
      %v658 = vmul.f32 %v594, 0.1
      %v659 = vmul.f32 %v595, 0.1
      %v660 = vmul.f32 %v596, 0.1
      %v661 = vmul.f32 %v597, 0.1
      %v662 = vmul.f32 %v598, 0.1
      %v663 = vmul.f32 %v599, 0.1
      %v664 = vmul.f32 %v600, 0.1
      %v665 = vmul.f32 %v601, 0.1
      %v666 = vmul.f32 %v602, 0.1
      %v667 = vmul.f32 %v603, 0.1
      %v668 = vmul.f32 %v604, 0.1
      %v669 = vmul.f32 %v605, 0.1
      %v670 = vmul.f32 %v606, 0.1
      %v671 = vmul.f32 %v607, 0.1
      %v672 = vmul.f32 %v608, 0.1
      %v673 = vmul.f32 %v609, 0.1
      %v674 = vmul.f32 %v610, 0.1
      %v675 = vmul.f32 %v611, 0.1
      %v676 = vmul.f32 %v612, 0.1
      %v677 = vmul.f32 %v613, 0.1
      %v678 = vmul.f32 %v614, 0.1
      %v679 = vmul.f32 %v615, 0.1
      %v680 = vmul.f32 %v616, 0.1
      %v681 = vmul.f32 %v617, 0.1
      %v682 = vmul.f32 %v618, 0.1
      %v683 = vmul.f32 %v619, 0.1
      %v684 = vmul.f32 %v620, 0.1
      %v685 = vmul.f32 %v621, 0.1
      %v686 = vmul.f32 %v622, 0.1
      %v687 = vmul.f32 %v623, 0.1
      %v688 = vmul.f32 %v624, 0.1
      %v689 = vmul.f32 %v625, 0.1
      %v690 = vsel %vm626, %v594, %v658
      %v691 = vsel %vm627, %v595, %v659
      %v692 = vsel %vm628, %v596, %v660
      %v693 = vsel %vm629, %v597, %v661
      %v694 = vsel %vm630, %v598, %v662
      %v695 = vsel %vm631, %v599, %v663
      %v696 = vsel %vm632, %v600, %v664
      %v697 = vsel %vm633, %v601, %v665
      %v698 = vsel %vm634, %v602, %v666
      %v699 = vsel %vm635, %v603, %v667
      %v700 = vsel %vm636, %v604, %v668
      %v701 = vsel %vm637, %v605, %v669
      %v702 = vsel %vm638, %v606, %v670
      %v703 = vsel %vm639, %v607, %v671
      %v704 = vsel %vm640, %v608, %v672
      %v705 = vsel %vm641, %v609, %v673
      %v706 = vsel %vm642, %v610, %v674
      %v707 = vsel %vm643, %v611, %v675
      %v708 = vsel %vm644, %v612, %v676
      %v709 = vsel %vm645, %v613, %v677
      %v710 = vsel %vm646, %v614, %v678
      %v711 = vsel %vm647, %v615, %v679
      %v712 = vsel %vm648, %v616, %v680
      %v713 = vsel %vm649, %v617, %v681
      %v714 = vsel %vm650, %v618, %v682
      %v715 = vsel %vm651, %v619, %v683
      %v716 = vsel %vm652, %v620, %v684
      %v717 = vsel %vm653, %v621, %v685
      %v718 = vsel %vm654, %v622, %v686
      %v719 = vsel %vm655, %v623, %v687
      %v720 = vsel %vm656, %v624, %v688
      %v721 = vsel %vm657, %v625, %v689
      %722 = vst [vmem:[%s199] sm:$0xff] %v690
      %723 = vst [vmem:[%s199 + $0x8] sm:$0xff] %v691
      %724 = vst [vmem:[%s199 + $0x10] sm:$0xff] %v692
      %725 = vst [vmem:[%s199 + $0x18] sm:$0xff] %v693
      %726 = vst [vmem:[%s199 + $0x20] sm:$0xff] %v694
      %727 = vst [vmem:[%s199 + $0x28] sm:$0xff] %v695
      %728 = vst [vmem:[%s199 + $0x30] sm:$0xff] %v696
      %729 = vst [vmem:[%s199 + $0x38] sm:$0xff] %v697
      %730 = vst [vmem:[%s199 + $0x40] sm:$0xff] %v698
      %731 = vst [vmem:[%s199 + $0x48] sm:$0xff] %v699
      %732 = vst [vmem:[%s199 + $0x50] sm:$0xff] %v700
      %733 = vst [vmem:[%s199 + $0x58] sm:$0xff] %v701
      %734 = vst [vmem:[%s199 + $0x60] sm:$0xff] %v702
      %735 = vst [vmem:[%s199 + $0x68] sm:$0xff] %v703
      %736 = vst [vmem:[%s199 + $0x70] sm:$0xff] %v704
      %737 = vst [vmem:[%s199 + $0x78] sm:$0xff] %v705
      %738 = vst [vmem:[%s199 + $0x80] sm:$0xff] %v706
      %739 = vst [vmem:[%s199 + $0x88] sm:$0xff] %v707
      %740 = vst [vmem:[%s199 + $0x90] sm:$0xff] %v708
      %741 = vst [vmem:[%s199 + $0x98] sm:$0xff] %v709
      %742 = vst [vmem:[%s199 + $0xa0] sm:$0xff] %v710
      %743 = vst [vmem:[%s199 + $0xa8] sm:$0xff] %v711
      %744 = vst [vmem:[%s199 + $0xb0] sm:$0xff] %v712
      %745 = vst [vmem:[%s199 + $0xb8] sm:$0xff] %v713
      %746 = vst [vmem:[%s199 + $0xc0] sm:$0xff] %v714
      %747 = vst [vmem:[%s199 + $0xc8] sm:$0xff] %v715
      %748 = vst [vmem:[%s199 + $0xd0] sm:$0xff] %v716
      %749 = vst [vmem:[%s199 + $0xd8] sm:$0xff] %v717
      %750 = vst [vmem:[%s199 + $0xe0] sm:$0xff] %v718
      %751 = vst [vmem:[%s199 + $0xe8] sm:$0xff] %v719
      %752 = vst [vmem:[%s199 + $0xf0] sm:$0xff] %v720
      %753 = vst [vmem:[%s199 + $0xf8] sm:$0xff] %v721
      %s754 = smul.u32 32, %s15
      %p755 = scmp.lt.s32.totalorder %s754, 63
      %s756 = scalar_select %p755, %s754, 63
      %s757 = smul.addr %s756, 8
      %s758 = scalar_lea.vmem %s4, %s757
      // Predicated region
      $region37: #{convolutional_layer.3} parent=35 // pred_check
        %p759 = pneg %p122
      $region38: #{convolutional_layer.3} parent=35 // pred_check_branch
        %761 = sbr.rel (%p759) target = $region40
      $region39: #{convolutional_layer.3} parent=35 // pred_region
        %s762 = smul.u32 32, %s15
      $region40: #{convolutional_layer.3} parent=35 // pred_fallthru
        _
    $region36: #{convolutional_layer.3} parent=5 // pred_fallthru
      _
    %p763 = scmp.le.s32.totalorder 2, %s10
    // Predicated region
    $region41: #{convolutional_layer.3} parent=5 // pred_check
      %p764 = pneg %p763
    $region42: #{convolutional_layer.3} parent=5 // pred_check_branch
      %766 = sbr.rel (%p764) target = $region44
    $region43: #{convolutional_layer.3} parent=5 // pred_region
      %s767 = ssub.s32 %s10, 2
      // Predicated region
      $region45: #{convolutional_layer.3} parent=43 // pred_check
        %p768 = pneg %p128
      $region46: #{convolutional_layer.3} parent=43 // pred_check_branch
        %770 = sbr.rel (%p768) target = $region48
      $region47: #{convolutional_layer.3} parent=43 // pred_region
        %s771 = smul.u32 32, %s16
        %p772 = scmp.lt.s32.totalorder %s771, 63
        %s773 = scalar_select %p772, %s771, 63
        %s774 = smul.addr %s773, 8
        %s775 = scalar_lea.vmem %s4, %s774
      $region48: #{convolutional_layer.3} parent=43 // pred_fallthru
        _
    $region44: #{convolutional_layer.3} parent=5 // pred_fallthru
      _
  $region6: #{convolutional_layer.3} parent=0 // loop_footer
    %s14 = sadd.s32 1, %s10
  $region7: #{convolutional_layer.3} parent=0 // loop_footer_branch
    %9 = sbr.rel target = $region3
  $region8: #{convolutional_layer.3} parent=0 // loop_exit
    _

</llo_original>
